<compile_context>
chip_gen: v6e
topology: v6e:2x2x1
jax: 0.10.0
libtpu: 0.0.40
codegen_flags: <defaults>
</compile_context>

<pallas_src>
import math
import functools

import jax
import jax.numpy as jnp
from jax.experimental import pallas as pl
from jax.experimental.pallas import tpu as pltpu


def _round_up(x: int, m: int) -> int:
    return (x + m - 1) // m * m


def _sublane_multiple(dtype) -> int:
    # Native sublane tile: 8 rows for 4-byte, 16 for 2-byte, 32 for 1-byte dtypes.
    return max(8, 32 // jnp.dtype(dtype).itemsize)


def _linear_ln_pe_kernel(x_ref, w_ref, b_ref, g_ref, beta_ref, pos_ref, o_ref,
                         *, eps, inv_n, n_pad):
    """Fused: y = LayerNorm(x @ W + b); out = y * gamma' + beta' + pos_emb.

    Shapes (odim padded to a multiple of 128, idim unpadded):
      x_ref   : (1, TM, idim)      one (time-tile, batch) block
      w_ref   : (idim, odim_p)     resident across the grid (constant block index)
      b_ref   : (1, odim_p)
      g_ref   : (1, odim_p)        gamma * sqrt(odim)   (xscale folded in)
      beta_ref: (1, odim_p)        beta  * sqrt(odim)
      pos_ref : (1, TM, odim_p)    positional-embedding tile, activation dtype
      o_ref   : (1, TM, odim_p)

    Padded odim columns of W/b are zero, so y is exactly zero there; the mean over the
    padded row equals the valid-column mean (divide by true odim), and the padded
    columns' contribution to sum((y-mean)^2) is exactly n_pad*mean^2, subtracted below.
    """
    # MXU matmul: native-dtype operands, f32 accumulation.
    y = jnp.dot(x_ref[0], w_ref[...], preferred_element_type=jnp.float32)
    y = y + b_ref[...].astype(jnp.float32)

    # LayerNorm statistics over the valid odim columns (two-pass, mean-subtracted).
    mean = jnp.sum(y, axis=-1, keepdims=True) * inv_n
    d = y - mean
    ss = jnp.sum(d * d, axis=-1, keepdims=True)
    if n_pad:  # analytic correction for the zero-padded columns
        ss = ss - float(n_pad) * (mean * mean)
    var = jnp.maximum(ss * inv_n, 0.0)
    yn = d * jax.lax.rsqrt(var + eps)

    out = (yn * g_ref[...].astype(jnp.float32)
           + beta_ref[...].astype(jnp.float32)
           + pos_ref[0].astype(jnp.float32))   # lazy upcast; pos streamed in act. dtype
    o_ref[0] = out.astype(o_ref.dtype)


def sinusoidal_pe(max_len: int, d_model: int, dtype=jnp.float32):
    """Standard WeNet/Transformer sinusoidal positional-encoding table (1, max_len, d_model)."""
    position = jnp.arange(max_len, dtype=jnp.float32)[:, None]
    div_term = jnp.exp(
        jnp.arange(0, d_model, 2, dtype=jnp.float32) * -(math.log(10000.0) / d_model))
    pe = jnp.zeros((max_len, d_model), dtype=jnp.float32)
    pe = pe.at[:, 0::2].set(jnp.sin(position * div_term))
    pe = pe.at[:, 1::2].set(jnp.cos(position * div_term))
    return pe[None].astype(dtype)


def linear_no_subsampling(xs, xs_len, x_mask, params, offset: int = 0, *, tm: int = 512):
    """Forward pass of LinearNoSubsampling. Returns (xs_out, xs_len, pos_emb, x_mask).

    NOTE: like the PyTorch module, time frames beyond xs_len are computed (and get
    pos_emb added) but are NOT masked; downstream consumers must keep using x_mask.
    """
    B, T, idim = xs.shape
    w = params["w"]            # (idim, odim)
    b = params["b"]            # (1, odim)
    gamma = params["gamma"]    # (1, odim)
    beta = params["beta"]      # (1, odim)
    pe = params["pe"]          # (1, max_len, odim)
    odim = w.shape[1]
    xscale = math.sqrt(float(odim))
    dtype = xs.dtype
    isz = jnp.dtype(dtype).itemsize

    # PositionalEncoding slice returned to the caller (same as the PyTorch module).
    pos_emb = jax.lax.dynamic_slice_in_dim(pe, offset, T, axis=1)  # (1, T, odim)

    # ---- lane padding on odim only -------------------------------------------------
    odim_p = _round_up(odim, 128)
    n_pad = odim_p - odim

    def padcols(a):
        return a if n_pad == 0 else jnp.pad(a, ((0, 0), (0, n_pad)))

    w_p = w if n_pad == 0 else jnp.pad(w, ((0, 0), (0, n_pad)))
    b_p = padcols(b)
    g_p = padcols(gamma * xscale)        # fold xscale into the LN affine
    beta_p = padcols(beta * xscale)
    pos_p = pos_emb.astype(dtype)        # stream pos in the activation dtype
    if n_pad:
        pos_p = jnp.pad(pos_p, ((0, 0), (0, 0), (0, n_pad)))

    # ---- time tiling ---------------------------------------------------------------
    sub = _sublane_multiple(dtype)
    TM = tm if T >= tm else _round_up(T, sub)
    TM = _round_up(TM, sub)

    def footprint(tm_):
        blk = 2 * (tm_ * idim + 2 * tm_ * odim_p) * isz        # double-buffered x/pos/out
        const = 2 * (idim * odim_p + 3 * odim_p) * isz         # resident W + affine
        temps = 6 * tm_ * odim_p * 4                           # f32 intermediates headroom
        return blk + const + temps

    budget = 32 * 1024 * 1024             # per-step VMEM target; safe on v5e/v6e/v7x
    while footprint(TM) > budget and TM > sub:
        TM = max(sub, _round_up(TM // 2, sub))

    num_t = pl.cdiv(T, TM)                # last tile may overrun T (OOB rows discarded)
    grid = (num_t, B)                     # batch INNER => pos tile reused across batch

    vmem_limit = int(min(max(int(1.25 * footprint(TM)), 16 * 1024 * 1024),
                         48 * 1024 * 1024))

    kernel = functools.partial(_linear_ln_pe_kernel,
                               eps=1e-12,               # matches nn.LayerNorm(odim, eps=1e-12)
                               inv_n=1.0 / float(odim),
                               n_pad=int(n_pad))

    out_p = pl.pallas_call(
        kernel,
        out_shape=jax.ShapeDtypeStruct((B, T, odim_p), dtype),
        grid=grid,
        in_specs=[
            pl.BlockSpec((1, TM, idim), lambda ti, bi: (bi, ti, 0)),        # x (unpadded idim)
            pl.BlockSpec((idim, odim_p), lambda ti, bi: (0, 0)),            # W resident
            pl.BlockSpec((1, odim_p), lambda ti, bi: (0, 0)),               # b
            pl.BlockSpec((1, odim_p), lambda ti, bi: (0, 0)),               # gamma'
            pl.BlockSpec((1, odim_p), lambda ti, bi: (0, 0)),               # beta'
            pl.BlockSpec((1, TM, odim_p), lambda ti, bi: (0, ti, 0)),       # pos (shared over B)
        ],
        out_specs=pl.BlockSpec((1, TM, odim_p), lambda ti, bi: (bi, ti, 0)),
        compiler_params=pltpu.CompilerParams(
            dimension_semantics=("parallel", "parallel"),
            vmem_limit_bytes=vmem_limit),
    )(xs, w_p, b_p, g_p, beta_p, pos_p)

    out = out_p if n_pad == 0 else out_p[..., :odim]
    return out, xs_len, pos_emb, x_mask


def _reference(xs, params, pos_emb):
    """Pure-JAX reference for correctness check."""
    w, b, gamma, beta = params["w"], params["b"], params["gamma"], params["beta"]
    odim = w.shape[1]
    y = jnp.einsum("bti,io->bto", xs, w) + b
    mean = jnp.mean(y, axis=-1, keepdims=True)
    var = jnp.mean((y - mean) ** 2, axis=-1, keepdims=True)
    yn = (y - mean) * jax.lax.rsqrt(var + 1e-12) * gamma + beta
    return yn * math.sqrt(float(odim)) + pos_emb


def _run_case(key, B, T, idim, odim, tm):
    k1, k2, k3, k4, k5 = jax.random.split(key, 5)
    xs = jax.random.normal(k1, (B, T, idim), jnp.float32)
    xs_len = jnp.array([T] + [max(1, T - 2)] * (B - 1), dtype=jnp.int32)
    x_mask = (jnp.arange(T)[None, None, :] < xs_len[:, None, None])  # (B, 1, T) bool

    params = {
        "w": jax.random.normal(k2, (idim, odim), jnp.float32) * (1.0 / math.sqrt(idim)),
        "b": jax.random.normal(k3, (1, odim), jnp.float32) * 0.02,
        "gamma": 1.0 + 0.1 * jax.random.normal(k4, (1, odim), jnp.float32),
        "beta": 0.02 * jax.random.normal(k5, (1, odim), jnp.float32),
        "pe": sinusoidal_pe(max_len=max(64, 2 * T), d_model=odim),
    }

    out, out_len, pos_emb, out_mask = linear_no_subsampling(
        xs, xs_len, x_mask, params, offset=0, tm=tm)
    jax.block_until_ready(out)

    ref = _reference(xs, params, pos_emb)
    assert out.shape == (B, T, odim)
    assert bool(jnp.all(jnp.isfinite(out)))
    assert jnp.allclose(out, ref, atol=1e-4, rtol=1e-4), float(jnp.max(jnp.abs(out - ref)))
    assert out_mask.shape == (B, 1, T)
    assert out_len.shape == (B,)


if __name__ == "__main__":
    key = jax.random.PRNGKey(0)
    ka, kb = jax.random.split(key)

    # Case 1: odim not a multiple of 128 -> exercises zero-padded odim columns + LN correction.
    _run_case(ka, B=2, T=8, idim=32, odim=64, tm=512)

    # Case 2: lane-aligned odim, small time tile -> exercises multi-tile grid with an
    # overrunning (non-divisible) last time tile and batch-inner pos reuse.
    _run_case(kb, B=2, T=20, idim=40, odim=128, tm=16)

    print("KERNEL_OK")
</pallas_src>

<mosaic_0001>
module attributes {stable_mosaic.version = 11 : i64} {
  func.func @_linear_ln_pe_kernel(%arg0: i32, %arg1: i32, %arg2: memref<1x8x32xf32, #tpu.memory_space<vmem>>, %arg3: memref<32x128xf32, #tpu.memory_space<vmem>>, %arg4: memref<1x128xf32, #tpu.memory_space<vmem>>, %arg5: memref<1x128xf32, #tpu.memory_space<vmem>>, %arg6: memref<1x128xf32, #tpu.memory_space<vmem>>, %arg7: memref<1x8x128xf32, #tpu.memory_space<vmem>>, %arg8: memref<1x8x128xf32, #tpu.memory_space<vmem>>) attributes {dimension_semantics = [#tpu.dimension_semantics<parallel>, #tpu.dimension_semantics<parallel>], iteration_bounds = array<i64: 1, 2>, scalar_prefetch = 0 : i64, scratch_operands = 0 : i64, tpu.core_type = #tpu.core_type<tc>, window_params = [{transform_indices = @transform_0, window_bounds = array<i64: 1, 8, 32>}, {pipeline_mode = #tpu.pipeline_mode<synchronous>, transform_indices = @transform_1, window_bounds = array<i64: 32, 128>}, {pipeline_mode = #tpu.pipeline_mode<synchronous>, transform_indices = @transform_2, window_bounds = array<i64: 1, 128>}, {pipeline_mode = #tpu.pipeline_mode<synchronous>, transform_indices = @transform_3, window_bounds = array<i64: 1, 128>}, {pipeline_mode = #tpu.pipeline_mode<synchronous>, transform_indices = @transform_4, window_bounds = array<i64: 1, 128>}, {transform_indices = @transform_5, window_bounds = array<i64: 1, 8, 128>}, {transform_indices = @transform_6, window_bounds = array<i64: 1, 8, 128>}]} {
    %c0 = arith.constant 0 : index
    %c0_0 = arith.constant 0 : index
    %c0_1 = arith.constant 0 : index
    %0 = vector.load %arg2[%c0, %c0_0, %c0_1] : memref<1x8x32xf32, #tpu.memory_space<vmem>>, vector<1x8x32xf32>
    %1 = vector.shape_cast %0 : vector<1x8x32xf32> to vector<8x32xf32>
    %c0_2 = arith.constant 0 : index
    %c0_3 = arith.constant 0 : index
    %2 = vector.load %arg3[%c0_2, %c0_3] : memref<32x128xf32, #tpu.memory_space<vmem>>, vector<32x128xf32>
    %cst = arith.constant dense<0.000000e+00> : vector<8x128xf32>
    %3 = tpu.matmul %1, %2, %cst {dimension_numbers = #tpu.dot_dimension_numbers<[1], [0], [0], [1], [0, 0, 1, 1], [], []>} : vector<8x32xf32>, vector<32x128xf32>, vector<8x128xf32> -> vector<8x128xf32>
    %c0_4 = arith.constant 0 : index
    %c0_5 = arith.constant 0 : index
    %4 = vector.load %arg4[%c0_4, %c0_5] : memref<1x128xf32, #tpu.memory_space<vmem>>, vector<1x128xf32>
    %5 = vector.broadcast %4 : vector<1x128xf32> to vector<8x128xf32>
    %6 = arith.addf %3, %5 : vector<8x128xf32>
    %cst_6 = arith.constant dense<0.000000e+00> : vector<8xf32>
    %7 = vector.multi_reduction <add>, %6, %cst_6 [1] : vector<8x128xf32> to vector<8xf32>
    %8 = vector.shape_cast %7 : vector<8xf32> to vector<8x1xf32>
    %cst_7 = arith.constant 1.562500e-02 : f32
    %9 = vector.broadcast %cst_7 : f32 to vector<8x1xf32>
    %10 = arith.mulf %8, %9 : vector<8x1xf32>
    %11 = vector.broadcast %10 : vector<8x1xf32> to vector<8x128xf32>
    %12 = arith.subf %6, %11 : vector<8x128xf32>
    %13 = arith.mulf %12, %12 : vector<8x128xf32>
    %cst_8 = arith.constant dense<0.000000e+00> : vector<8xf32>
    %14 = vector.multi_reduction <add>, %13, %cst_8 [1] : vector<8x128xf32> to vector<8xf32>
    %15 = vector.shape_cast %14 : vector<8xf32> to vector<8x1xf32>
    %16 = arith.mulf %10, %10 : vector<8x1xf32>
    %cst_9 = arith.constant 6.400000e+01 : f32
    %17 = vector.broadcast %cst_9 : f32 to vector<8x1xf32>
    %18 = arith.mulf %17, %16 : vector<8x1xf32>
    %19 = arith.subf %15, %18 : vector<8x1xf32>
    %cst_10 = arith.constant 1.562500e-02 : f32
    %20 = vector.broadcast %cst_10 : f32 to vector<8x1xf32>
    %21 = arith.mulf %19, %20 : vector<8x1xf32>
    %cst_11 = arith.constant 0.000000e+00 : f32
    %22 = vector.broadcast %cst_11 : f32 to vector<8x1xf32>
    %23 = arith.maximumf %21, %22 : vector<8x1xf32>
    %cst_12 = arith.constant 9.99999996E-13 : f32
    %24 = vector.broadcast %cst_12 : f32 to vector<8x1xf32>
    %25 = arith.addf %23, %24 : vector<8x1xf32>
    %26 = math.rsqrt %25 : vector<8x1xf32>
    %27 = vector.broadcast %26 : vector<8x1xf32> to vector<8x128xf32>
    %28 = arith.mulf %12, %27 : vector<8x128xf32>
    %c0_13 = arith.constant 0 : index
    %c0_14 = arith.constant 0 : index
    %29 = vector.load %arg5[%c0_13, %c0_14] : memref<1x128xf32, #tpu.memory_space<vmem>>, vector<1x128xf32>
    %30 = vector.broadcast %29 : vector<1x128xf32> to vector<8x128xf32>
    %31 = arith.mulf %28, %30 : vector<8x128xf32>
    %c0_15 = arith.constant 0 : index
    %c0_16 = arith.constant 0 : index
    %32 = vector.load %arg6[%c0_15, %c0_16] : memref<1x128xf32, #tpu.memory_space<vmem>>, vector<1x128xf32>
    %33 = vector.broadcast %32 : vector<1x128xf32> to vector<8x128xf32>
    %34 = arith.addf %31, %33 : vector<8x128xf32>
    %c0_17 = arith.constant 0 : index
    %c0_18 = arith.constant 0 : index
    %c0_19 = arith.constant 0 : index
    %35 = vector.load %arg7[%c0_17, %c0_18, %c0_19] : memref<1x8x128xf32, #tpu.memory_space<vmem>>, vector<1x8x128xf32>
    %36 = vector.shape_cast %35 : vector<1x8x128xf32> to vector<8x128xf32>
    %37 = arith.addf %34, %36 : vector<8x128xf32>
    %c0_20 = arith.constant 0 : index
    %c0_21 = arith.constant 0 : index
    %c0_22 = arith.constant 0 : index
    %38 = vector.load %arg8[%c0_20, %c0_21, %c0_22] : memref<1x8x128xf32, #tpu.memory_space<vmem>>, vector<1x8x128xf32>
    %39 = vector.shape_cast %38 : vector<1x8x128xf32> to vector<8x128xf32>
    %40 = vector.shape_cast %37 : vector<8x128xf32> to vector<1x8x128xf32>
    tpu.vector_store %arg8[%c0_20, %c0_21, %c0_22], %40 {strides = array<i32>} : memref<1x8x128xf32, #tpu.memory_space<vmem>>, vector<1x8x128xf32>,
    return
  }
  func.func @transform_0(%arg0: i32, %arg1: i32) -> (i32, i32, i32) {
    %c0_i32 = arith.constant 0 : i32
    %c0_i32_0 = arith.constant 0 : i32
    return %arg1, %arg0, %c0_i32 : i32, i32, i32
  }
  func.func @transform_1(%arg0: i32, %arg1: i32) -> (i32, i32) {
    %c0_i32 = arith.constant 0 : i32
    %c0_i32_0 = arith.constant 0 : i32
    %c0_i32_1 = arith.constant 0 : i32
    return %c0_i32, %c0_i32_0 : i32, i32
  }
  func.func @transform_2(%arg0: i32, %arg1: i32) -> (i32, i32) {
    %c0_i32 = arith.constant 0 : i32
    %c0_i32_0 = arith.constant 0 : i32
    %c0_i32_1 = arith.constant 0 : i32
    return %c0_i32, %c0_i32_0 : i32, i32
  }
  func.func @transform_3(%arg0: i32, %arg1: i32) -> (i32, i32) {
    %c0_i32 = arith.constant 0 : i32
    %c0_i32_0 = arith.constant 0 : i32
    %c0_i32_1 = arith.constant 0 : i32
    return %c0_i32, %c0_i32_0 : i32, i32
  }
  func.func @transform_4(%arg0: i32, %arg1: i32) -> (i32, i32) {
    %c0_i32 = arith.constant 0 : i32
    %c0_i32_0 = arith.constant 0 : i32
    %c0_i32_1 = arith.constant 0 : i32
    return %c0_i32, %c0_i32_0 : i32, i32
  }
  func.func @transform_5(%arg0: i32, %arg1: i32) -> (i32, i32, i32) {
    %c0_i32 = arith.constant 0 : i32
    %c0_i32_0 = arith.constant 0 : i32
    %c0_i32_1 = arith.constant 0 : i32
    return %c0_i32, %arg0, %c0_i32_0 : i32, i32, i32
  }
  func.func @transform_6(%arg0: i32, %arg1: i32) -> (i32, i32, i32) {
    %c0_i32 = arith.constant 0 : i32
    %c0_i32_0 = arith.constant 0 : i32
    return %arg1, %arg0, %c0_i32 : i32, i32, i32
  }
}

</mosaic_0001>

<llo_original>
// kernel: tpu_custom_call.1
$region0: #{tpu_custom_call.1}
  #allocation0 [shape = 'u32[]', space=smem, size = 0x4, offset = 0x4, fixed_abs, tag = 'smem constant byte address 0x4 - core index']
  #allocation1 [shape = 'u32[144,128]{1,0:T(1,128)}', space=vmem, size = 0x12000, scoped, tag = 'internal scratch']
  %s0 = inlined_call_operand.hbm [shape: f32[2,8,32], index: 0, kind: input, shape index: {}]
  %s1 = inlined_call_operand.hbm [shape: f32[32,128], index: 1, kind: input, shape index: {}]
  %s2 = inlined_call_operand.vmem [shape: f32[1,128], index: 2, kind: input, shape index: {}]
  %s3 = inlined_call_operand.hbm [shape: f32[1,128], index: 3, kind: input, shape index: {}]
  %s4 = inlined_call_operand.hbm [shape: f32[1,128], index: 4, kind: input, shape index: {}]
  %s5 = inlined_call_operand.vmem [shape: f32[1,8,128], index: 5, kind: input, shape index: {}]
  %s6 = inlined_call_operand.hbm [shape: f32[2,8,128], index: 6, kind: output, shape index: {}]
  %s7 = sld [smem:[#allocation0]]
  $region73: #{tpu_custom_call.1} parent=0
    _
  %s9 = ssub.s32 1, %s7
  %s10 = scalar_select 0, %s9, %s7
  $region1: #{tpu_custom_call.1} parent=0
    #allocation2 [shape = 'u8[8192]{0}', space=vmem, size = 0x2000, scoped, tag = 'input window, operand 0']
    #allocation3 [shape = 's32[2]{0}', space=sflag, size = 0x8, scoped, tag = 'scoped memory for tpu_custom_call.1']
    #allocation4 [shape = 's32[2]{0}', space=sflag, size = 0x8, scoped, tag = 'scoped memory for tpu_custom_call.1']
    #allocation5 [shape = 'u8[16384]{0}', space=vmem, size = 0x4000, scoped, tag = 'input window, operand 1, single buffered']
    #allocation6 [shape = 's32[1]{0}', space=sflag, size = 0x4, scoped, tag = 'scoped memory for tpu_custom_call.1']
    #allocation7 [shape = 'u8[512]{0}', space=vmem, size = 0x400, scoped, tag = 'input window, operand 3, single buffered']
    #allocation8 [shape = 'u8[512]{0}', space=vmem, size = 0x400, scoped, tag = 'input window, operand 4, single buffered']
    #allocation9 [shape = 's32[1]{0}', space=sflag, size = 0x4, scoped, tag = 'scoped memory for tpu_custom_call.1']
    #allocation10 [shape = 'u8[8192]{0}', space=vmem, size = 0x2000, scoped, tag = 'output window, operand 0']
    %11 = vsyncpa [#allocation3], 0
    %s12 = scalar_lea.sflag [#allocation3], 1
    %13 = vsyncpa %s12, 0
    %14 = vsyncpa [#allocation6], 0
    %15 = vsyncpa [#allocation9], 0
    %16 = vsyncpa [#allocation4], 0
    %s17 = scalar_lea.sflag [#allocation4], 1
    %18 = vsyncpa %s17, 0
    loop: start=0, step=1, limit=4
    $region2: #{tpu_custom_call.1} parent=1 // loop_pre_header
      _
    $region3: #{tpu_custom_call.1} parent=1 // loop_header
      %s20 = sphi 0, %s24
      %p21 = scmp.ge.s32.totalorder %s20, 4
      %s27 = sphi 0, %s39
      %s28 = sphi 0, %s35
      %s29 = sphi 0, %s27
      %s30 = sphi 0, %s28
      %s31 = sphi 0, %s29
      %s32 = sphi 0, %s30
      %s44 = sphi 0, %s46
      %s47 = sphi 0, %s44
      %s48 = sphi 0, %s47
      %s64 = sphi 0, %s48
      %s68 = sphi 0, %s68
      %s70 = sphi 0, %s68
      %s71 = sphi 0, %s70
      %s85 = sphi 0, %s71
      %s89 = sphi 0, %s89
      %s91 = sphi 0, %s89
      %s92 = sphi 0, %s91
      %s106 = sphi 0, %s92
      %s110 = sphi 0, %s110
      %s112 = sphi 0, %s110
      %s113 = sphi 0, %s112
      %s127 = sphi 0, %s113
      %s131 = sphi 0, %s131
      %s133 = sphi 0, %s131
      %s134 = sphi 0, %s133
      %s148 = sphi 0, %s134
      %s154 = sphi 0, %s156
      %s157 = sphi 0, %s154
      %s158 = sphi 0, %s157
      %s174 = sphi 0, %s158
      %s182 = sphi 0, %s184
      %s185 = sphi 0, %s182
      %s186 = sphi 0, %s185
      %s202 = sphi 0, %s186
    $region4: #{tpu_custom_call.1} parent=1 // loop_header_branch
      %23 = sbr.rel (%p21) target = $region8
    $region5: #{tpu_custom_call.1} parent=1 // loop_body
      %s25 = ssub.s32 %s20, 1
      %s26 = ssub.s32 %s20, 2
      %s33 = sadd.s32 1, %s28
      %p34 = scmp.ge.s32.totalorder %s33, 2
      %s35 = scalar_select %p34, 0, %s33
      %s36 = sadd.s32 1, %s27
      %s37 = scalar_select %p34, %s36, %s27
      %p38 = scmp.ge.s32.totalorder %s37, 1
      %s39 = scalar_select %p38, 0, %s37
      %s40 = ssub.s32 %s28, %s35
      %s41 = ssub.s32 %s27, %s39
      %s42 = sor.u32 %s40, %s41
      %p43 = scmp.eq.s32.totalorder %s42, 0
      %s45 = sadd.s32 %s44, 1
      %s46 = scalar_select %p43, %s44, %s45
      %p49 = pneg %p43
      %p50 = scmp.eq.s32.totalorder %s20, 1
      %p51 = por %p49, %p50
      %p52 = scmp.ne.s32.totalorder %s44, %s47
      %p53 = scmp.eq.s32.totalorder %s20, 0
      %p54 = por %p52, %p53
      %p55 = scmp.ne.s32.totalorder %s44, %s47
      %p56 = scmp.eq.s32.totalorder %s25, 1
      %p57 = por %p55, %p56
      %p58 = scmp.ne.s32.totalorder %s47, %s48
      %p59 = scmp.eq.s32.totalorder %s25, 0
      %p60 = por %p58, %p59
      %p61 = scmp.ne.s32.totalorder %s47, %s48
      %p62 = scmp.eq.s32.totalorder %s26, 1
      %p63 = por %p61, %p62
      %p65 = scmp.ne.s32.totalorder %s48, %s64
      %p66 = scmp.eq.s32.totalorder %s26, 0
      %p67 = por %p65, %p66
      %s69 = sadd.s32 %s68, 1
      %p72 = scmp.eq.s32.totalorder %s20, 1
      %p73 = scmp.ne.s32.totalorder %s68, %s70
      %p74 = scmp.eq.s32.totalorder %s20, 0
      %p75 = por %p73, %p74
      %p76 = scmp.ne.s32.totalorder %s68, %s70
      %p77 = scmp.eq.s32.totalorder %s25, 1
      %p78 = por %p76, %p77
      %p79 = scmp.ne.s32.totalorder %s70, %s71
      %p80 = scmp.eq.s32.totalorder %s25, 0
      %p81 = por %p79, %p80
      %p82 = scmp.ne.s32.totalorder %s70, %s71
      %p83 = scmp.eq.s32.totalorder %s26, 1
      %p84 = por %p82, %p83
      %p86 = scmp.ne.s32.totalorder %s71, %s85
      %p87 = scmp.eq.s32.totalorder %s26, 0
      %p88 = por %p86, %p87
      %s90 = sadd.s32 %s89, 1
      %p93 = scmp.eq.s32.totalorder %s20, 1
      %p94 = scmp.ne.s32.totalorder %s89, %s91
      %p95 = scmp.eq.s32.totalorder %s20, 0
      %p96 = por %p94, %p95
      %p97 = scmp.ne.s32.totalorder %s89, %s91
      %p98 = scmp.eq.s32.totalorder %s25, 1
      %p99 = por %p97, %p98
      %p100 = scmp.ne.s32.totalorder %s91, %s92
      %p101 = scmp.eq.s32.totalorder %s25, 0
      %p102 = por %p100, %p101
      %p103 = scmp.ne.s32.totalorder %s91, %s92
      %p104 = scmp.eq.s32.totalorder %s26, 1
      %p105 = por %p103, %p104
      %p107 = scmp.ne.s32.totalorder %s92, %s106
      %p108 = scmp.eq.s32.totalorder %s26, 0
      %p109 = por %p107, %p108
      %s111 = sadd.s32 %s110, 1
      %p114 = scmp.eq.s32.totalorder %s20, 1
      %p115 = scmp.ne.s32.totalorder %s110, %s112
      %p116 = scmp.eq.s32.totalorder %s20, 0
      %p117 = por %p115, %p116
      %p118 = scmp.ne.s32.totalorder %s110, %s112
      %p119 = scmp.eq.s32.totalorder %s25, 1
      %p120 = por %p118, %p119
      %p121 = scmp.ne.s32.totalorder %s112, %s113
      %p122 = scmp.eq.s32.totalorder %s25, 0
      %p123 = por %p121, %p122
      %p124 = scmp.ne.s32.totalorder %s112, %s113
      %p125 = scmp.eq.s32.totalorder %s26, 1
      %p126 = por %p124, %p125
      %p128 = scmp.ne.s32.totalorder %s113, %s127
      %p129 = scmp.eq.s32.totalorder %s26, 0
      %p130 = por %p128, %p129
      %s132 = sadd.s32 %s131, 1
      %p135 = scmp.eq.s32.totalorder %s20, 1
      %p136 = scmp.ne.s32.totalorder %s131, %s133
      %p137 = scmp.eq.s32.totalorder %s20, 0
      %p138 = por %p136, %p137
      %p139 = scmp.ne.s32.totalorder %s131, %s133
      %p140 = scmp.eq.s32.totalorder %s25, 1
      %p141 = por %p139, %p140
      %p142 = scmp.ne.s32.totalorder %s133, %s134
      %p143 = scmp.eq.s32.totalorder %s25, 0
      %p144 = por %p142, %p143
      %p145 = scmp.ne.s32.totalorder %s133, %s134
      %p146 = scmp.eq.s32.totalorder %s26, 1
      %p147 = por %p145, %p146
      %p149 = scmp.ne.s32.totalorder %s134, %s148
      %p150 = scmp.eq.s32.totalorder %s26, 0
      %p151 = por %p149, %p150
      %s152 = ssub.s32 %s27, %s39
      %p153 = scmp.eq.s32.totalorder %s152, 0
      %s155 = sadd.s32 %s154, 1
      %s156 = scalar_select %p153, %s154, %s155
      %p159 = pneg %p153
      %p160 = scmp.eq.s32.totalorder %s20, 1
      %p161 = por %p159, %p160
      %p162 = scmp.ne.s32.totalorder %s154, %s157
      %p163 = scmp.eq.s32.totalorder %s20, 0
      %p164 = por %p162, %p163
      %p165 = scmp.ne.s32.totalorder %s154, %s157
      %p166 = scmp.eq.s32.totalorder %s25, 1
      %p167 = por %p165, %p166
      %p168 = scmp.ne.s32.totalorder %s157, %s158
      %p169 = scmp.eq.s32.totalorder %s25, 0
      %p170 = por %p168, %p169
      %p171 = scmp.ne.s32.totalorder %s157, %s158
      %p172 = scmp.eq.s32.totalorder %s26, 1
      %p173 = por %p171, %p172
      %p175 = scmp.ne.s32.totalorder %s158, %s174
      %p176 = scmp.eq.s32.totalorder %s26, 0
      %p177 = por %p175, %p176
      %s178 = ssub.s32 %s28, %s35
      %s179 = ssub.s32 %s27, %s39
      %s180 = sor.u32 %s178, %s179
      %p181 = scmp.eq.s32.totalorder %s180, 0
      %s183 = sadd.s32 %s182, 1
      %s184 = scalar_select %p181, %s182, %s183
      %p187 = pneg %p181
      %p188 = scmp.eq.s32.totalorder %s20, 1
      %p189 = por %p187, %p188
      %p190 = scmp.ne.s32.totalorder %s182, %s185
      %p191 = scmp.eq.s32.totalorder %s20, 0
      %p192 = por %p190, %p191
      %p193 = scmp.ne.s32.totalorder %s182, %s185
      %p194 = scmp.eq.s32.totalorder %s25, 1
      %p195 = por %p193, %p194
      %p196 = scmp.ne.s32.totalorder %s185, %s186
      %p197 = scmp.eq.s32.totalorder %s25, 0
      %p198 = por %p196, %p197
      %p199 = scmp.ne.s32.totalorder %s185, %s186
      %p200 = scmp.eq.s32.totalorder %s26, 1
      %p201 = por %p199, %p200
      %p203 = scmp.ne.s32.totalorder %s186, %s202
      %p204 = scmp.eq.s32.totalorder %s26, 0
      %p205 = por %p203, %p204
      %p206 = scmp.le.s32.totalorder 1, %s20
      %p207 = scmp.lt.s32.totalorder %s20, 3
      %p208 = pnand %p206, %p207
      %p209 = pneg %p208
      // Predicated region
      $region9: #{tpu_custom_call.1} parent=5 // pred_check
        _
      $region10: #{tpu_custom_call.1} parent=5 // pred_check_branch
        %211 = sbr.rel (%p208) target = $region12
      $region11: #{tpu_custom_call.1} parent=5 // pred_region
        %s212 = ssub.s32 %s20, 1
        // Predicated region
        $region13: #{tpu_custom_call.1} parent=11 // pred_check
          %p213 = pneg %p81
        $region14: #{tpu_custom_call.1} parent=11 // pred_check_branch
          %215 = sbr.rel (%p213) target = $region16
        $region15: #{tpu_custom_call.1} parent=11 // pred_region
          %s217 = ssub.s32 512, 512
          %218 = vsyncadd [#allocation6], %s217
          %s219 = sshll.u32 [#allocation5], 4
          %s220 = int_to_ptr.vmem [resolvable:$true] %s219
          %225 = dma.hbm_to_vmem [thread:$0]  %s1, 512, %s220, [#allocation6], 128, 128, 8
        $region16: #{tpu_custom_call.1} parent=11 // pred_fallthru
          _
        // Predicated region
        $region17: #{tpu_custom_call.1} parent=11 // pred_check
          %p226 = pneg %p102
        $region18: #{tpu_custom_call.1} parent=11 // pred_check_branch
          %228 = sbr.rel (%p226) target = $region20
        $region19: #{tpu_custom_call.1} parent=11 // pred_region
          _
        $region20: #{tpu_custom_call.1} parent=11 // pred_fallthru
          _
        // Predicated region
        $region21: #{tpu_custom_call.1} parent=11 // pred_check
          %p229 = pneg %p123
        $region22: #{tpu_custom_call.1} parent=11 // pred_check_branch
          %231 = sbr.rel (%p229) target = $region24
        $region23: #{tpu_custom_call.1} parent=11 // pred_region
          %s233 = ssub.s32 16, 16
          %234 = vsyncadd [#allocation6], %s233
          %s236 = sshll.u32 [#allocation7], 4
          %s237 = int_to_ptr.vmem [resolvable:$true] %s236
          %239 = dma.hbm_to_vmem [thread:$0]  %s3, 16, %s237, [#allocation6]
        $region24: #{tpu_custom_call.1} parent=11 // pred_fallthru
          _
        // Predicated region
        $region25: #{tpu_custom_call.1} parent=11 // pred_check
          %p240 = pneg %p144
        $region26: #{tpu_custom_call.1} parent=11 // pred_check_branch
          %242 = sbr.rel (%p240) target = $region28
        $region27: #{tpu_custom_call.1} parent=11 // pred_region
          %s244 = ssub.s32 16, 16
          %245 = vsyncadd [#allocation9], %s244
          %s247 = sshll.u32 [#allocation8], 4
          %s248 = int_to_ptr.vmem [resolvable:$true] %s247
          %250 = dma.hbm_to_vmem [thread:$0]  %s4, 16, %s248, [#allocation9]
        $region28: #{tpu_custom_call.1} parent=11 // pred_fallthru
          _
        // Predicated region
        $region29: #{tpu_custom_call.1} parent=11 // pred_check
          %p251 = pneg %p170
        $region30: #{tpu_custom_call.1} parent=11 // pred_check_branch
          %253 = sbr.rel (%p251) target = $region32
        $region31: #{tpu_custom_call.1} parent=11 // pred_region
          %p254 = scmp.lt.s32.totalorder %s29, 0
          %s255 = scalar_select %p254, %s29, 0
          %s256 = smul.addr %s255, 8
          %s257 = scalar_lea.vmem %s5, %s256
        $region32: #{tpu_custom_call.1} parent=11 // pred_fallthru
          _
      $region12: #{tpu_custom_call.1} parent=5 // pred_fallthru
        _
      %p258 = scmp.lt.s32.totalorder %s20, 2
      // Predicated region
      $region33: #{tpu_custom_call.1} parent=5 // pred_check
        %p259 = pneg %p258
      $region34: #{tpu_custom_call.1} parent=5 // pred_check_branch
        %261 = sbr.rel (%p259) target = $region36
      $region35: #{tpu_custom_call.1} parent=5 // pred_region
        // Predicated region
        $region37: #{tpu_custom_call.1} parent=35 // pred_check
          %p262 = pneg %p54
        $region38: #{tpu_custom_call.1} parent=35 // pred_check_branch
          %264 = sbr.rel (%p262) target = $region40
        $region39: #{tpu_custom_call.1} parent=35 // pred_region
          %s265 = sand.u32 %s44, 1
          %s266 = scalar_lea.sflag [#allocation3], %s265
          %s267 = sand.u32 %s44, 1
          %s268 = smul.addr %s267, 8
          %s269 = scalar_lea.vmem [#allocation2], %s268
          %s271 = ssub.s32 128, 128
          %272 = vsyncadd %s266, %s271
          %s273 = sadd.s32 %s27, %s28
          %s274 = smul.addr %s273, 128
          %s275 = scalar_lea.hbm %s0, %s274
          %s277 = sshll.u32 %s269, 4
          %s278 = int_to_ptr.vmem [resolvable:$true] %s277
          %280 = dma.hbm_to_vmem [thread:$0]  %s275, 128, %s278, %s266
        $region40: #{tpu_custom_call.1} parent=35 // pred_fallthru
          _
      $region36: #{tpu_custom_call.1} parent=5 // pred_fallthru
        _
      %p281 = scmp.le.s32.totalorder 1, %s20
      %p282 = scmp.lt.s32.totalorder %s20, 3
      %p283 = pnand %p281, %p282
      %p284 = pneg %p283
      // Predicated region
      $region41: #{tpu_custom_call.1} parent=5 // pred_check
        _
      $region42: #{tpu_custom_call.1} parent=5 // pred_check_branch
        %286 = sbr.rel (%p283) target = $region44
      $region43: #{tpu_custom_call.1} parent=5 // pred_region
        %s287 = ssub.s32 %s20, 1
        %s288 = sand.u32 %s47, 1
        %s289 = scalar_lea.sflag [#allocation3], %s288
        %s290 = sand.u32 %s47, 1
        %s291 = smul.addr %s290, 8
        %s292 = scalar_lea.vmem [#allocation2], %s291
        // Predicated region
        $region45: #{tpu_custom_call.1} parent=43 // pred_check
          %p293 = pneg %p60
        $region46: #{tpu_custom_call.1} parent=43 // pred_check_branch
          %295 = sbr.rel (%p293) target = $region48
        $region47: #{tpu_custom_call.1} parent=43 // pred_region
          %296 = dma.done %s289, 128
        $region48: #{tpu_custom_call.1} parent=43 // pred_fallthru
          _
        // Predicated region
        $region49: #{tpu_custom_call.1} parent=43 // pred_check
          %p297 = pneg %p81
        $region50: #{tpu_custom_call.1} parent=43 // pred_check_branch
          %299 = sbr.rel (%p297) target = $region52
        $region51: #{tpu_custom_call.1} parent=43 // pred_region
          %300 = dma.done [#allocation6], 512
        $region52: #{tpu_custom_call.1} parent=43 // pred_fallthru
          _
        // Predicated region
        $region53: #{tpu_custom_call.1} parent=43 // pred_check
          %p301 = pneg %p123
        $region54: #{tpu_custom_call.1} parent=43 // pred_check_branch
          %303 = sbr.rel (%p301) target = $region56
        $region55: #{tpu_custom_call.1} parent=43 // pred_region
          %304 = dma.done [#allocation6], 16
        $region56: #{tpu_custom_call.1} parent=43 // pred_fallthru
          _
        // Predicated region
        $region57: #{tpu_custom_call.1} parent=43 // pred_check
          %p305 = pneg %p144
        $region58: #{tpu_custom_call.1} parent=43 // pred_check_branch
          %307 = sbr.rel (%p305) target = $region60
        $region59: #{tpu_custom_call.1} parent=43 // pred_region
          %308 = dma.done [#allocation9], 16
        $region60: #{tpu_custom_call.1} parent=43 // pred_fallthru
          _
        %s309 = sand.u32 %s47, 1
        %s310 = scalar_lea.sflag [#allocation3], %s309
        %s311 = sand.u32 %s47, 1
        %s312 = smul.addr %s311, 8
        %s313 = scalar_lea.vmem [#allocation2], %s312
        %p314 = pneg %p60
        %p315 = pneg %p57
        %p316 = pneg %p81
        %p317 = pneg %p78
        %p318 = pneg %p102
        %p319 = pneg %p99
        %p320 = pneg %p123
        %p321 = pneg %p120
        %p322 = pneg %p144
        %p323 = pneg %p141
        %p324 = scmp.lt.s32.totalorder %s29, 0
        %s325 = scalar_select %p324, %s29, 0
        %s326 = smul.addr %s325, 8
        %s327 = scalar_lea.vmem %s5, %s326
        %p328 = pneg %p170
        %p329 = pneg %p167
        %p330 = pneg %p198
        %p331 = pneg %p195
        %s332 = sand.u32 %s185, 1
        %s333 = scalar_lea.sflag [#allocation4], %s332
        %s334 = sand.u32 %s185, 1
        %s335 = smul.addr %s334, 8
        %s336 = scalar_lea.vmem [#allocation10], %s335
        %p337 = scmp.lt.s32.totalorder %s29, 0
        %s338 = scalar_select %p337, %s29, 0
        %s339 = smul.addr %s338, 8
        %s340 = scalar_lea.vmem %s5, %s339
        %v341 = vld [vmem:[%s292] sm:$0xff]
        %v342 = vld [vmem:[#allocation5] sm:$0xff]
        %v343 = vld [vmem:[#allocation5 + $0x8] sm:$0xff]
        %v344 = vld [vmem:[#allocation5 + $0x10] sm:$0xff]
        %v345 = vld [vmem:[#allocation5 + $0x18] sm:$0xff]
        %v346 = vld [vmem:[%s2] sm:$0x1]
        %v348 = vlaneseq
        %v349 = vshrl.u32 %v348, 7
        %v350 = vsub.s32 0, %v349
        %v351 = vrot.slane %v346, %v350
        %vm353 = vcmask 261120
        %v355 = vsel %vm353, %v341, 0
        %357 = vmatprep.subr.mxu0 0.0
        %358 = vmatpush1.msra.mxu0 0.0
        %359 = vmatprep.subr.mxu0 0.0
        %360 = vmatpush1.msra.mxu0 0.0
        %361 = vmatprep.subr.mxu0 0.0
        %362 = vmatpush1.msra.mxu0 0.0
        %363 = vmatprep.subr.mxu0 0.0
        %364 = vmatpush1.msra.mxu0 0.0
        %365 = vmatprep.subr.mxu0 0.0
        %366 = vmatpush1.msra.mxu0 0.0
        %367 = vmatprep.subr.mxu0 0.0
        %368 = vmatpush1.msra.mxu0 0.0
        %369 = vmatprep.subr.mxu0 0.0
        %370 = vmatpush1.msra.mxu0 0.0
        %371 = vmatprep.subr.mxu0 0.0
        %372 = vmatpush1.msra.mxu0 0.0
        %373 = vmatprep.subr.mxu0 0.0
        %374 = vmatpush1.msra.mxu0 0.0
        %375 = vmatprep.subr.mxu0 0.0
        %376 = vmatpush1.msra.mxu0 0.0
        %377 = vmatprep.subr.mxu0 0.0
        %378 = vmatpush1.msra.mxu0 0.0
        %379 = vmatprep.subr.mxu0 0.0
        %380 = vmatpush1.msra.mxu0 0.0
        %381 = vmatprep.subr.mxu0 0.0
        %382 = vmatpush1.msra.mxu0 %v345
        %383 = vmatprep.subr.mxu0 0.0
        %384 = vmatpush1.msra.mxu0 %v344
        %385 = vmatprep.subr.mxu0 0.0
        %386 = vmatpush1.msra.mxu0 %v343
        %387 = vmatprep.subr.mxu0 0.0
        %388 = vmatpush1.msra.mxu0 %v342
        %389 = vmatprep.subr.mxu0 0.0
        %390 = vmatpush2.msra.mxu0 0.0
        %391 = vmatprep.subr.mxu0 0.0
        %392 = vmatpush2.msra.mxu0 0.0
        %393 = vmatprep.subr.mxu0 0.0
        %394 = vmatpush2.msra.mxu0 0.0
        %395 = vmatprep.subr.mxu0 0.0
        %396 = vmatpush2.msra.mxu0 0.0
        %397 = vmatprep.subr.mxu0 0.0
        %398 = vmatpush2.msra.mxu0 0.0
        %399 = vmatprep.subr.mxu0 0.0
        %400 = vmatpush2.msra.mxu0 0.0
        %401 = vmatprep.subr.mxu0 0.0
        %402 = vmatpush2.msra.mxu0 0.0
        %403 = vmatprep.subr.mxu0 0.0
        %404 = vmatpush2.msra.mxu0 0.0
        %405 = vmatprep.subr.mxu0 0.0
        %406 = vmatpush2.msra.mxu0 0.0
        %407 = vmatprep.subr.mxu0 0.0
        %408 = vmatpush2.msra.mxu0 0.0
        %409 = vmatprep.subr.mxu0 0.0
        %410 = vmatpush2.msra.mxu0 0.0
        %411 = vmatprep.subr.mxu0 0.0
        %412 = vmatpush2.msra.mxu0 0.0
        %413 = vmatprep.subr.mxu0 0.0
        %414 = vmatpush2.msra.mxu0 0.0
        %415 = vmatprep.subr.mxu0 0.0
        %416 = vmatpush2.msra.mxu0 0.0
        %417 = vmatprep.subr.mxu0 0.0
        %418 = vmatpush2.msra.mxu0 0.0
        %419 = vmatprep.subr.mxu0 0.0
        %420 = vmatpush2.msra.mxu0 0.0
        %421 = vmatprep.mubr.f32.mxu0 0.0
        %422 = vmatmul.mubr.f32.gmra.mxu0 %v355
        %v423 = vpop.f32.mrf.mxu0
        %v424 = vadd.f32 %v351, %v423
        %v425 = vpop.f32.mrf.mxu0
        %426 = vdwg.mxu0
        %427 = vadd.xlane.f32.xlu0 %v424
        %v428 = vpop.xlane.xlu0 %427
        %v429 = vmul.f32 %v428, 0.015625
        %v430 = vsub.f32 %v424, %v429
        %v431 = vmul.f32 %v430, %v430
        %432 = vadd.xlane.f32.xlu0 %v431
        %v433 = vpop.xlane.xlu0 %432
        %v434 = vmul.f32 %v429, %v429
        %v435 = vmul.f32 %v434, 64.0
        %v436 = vsub.f32 %v433, %v435
        %v437 = vmul.f32 %v436, 0.015625
        %v438 = vmax.f32 %v437, 0.0
        %v439 = vadd.f32 %v438, 1e-12
        %v440 = vrsqrt.pop %v439
        %v441 = vmul.f32 %v430, %v440
        %v442 = vld [vmem:[#allocation7] sm:$0x1]
        %v444 = vlaneseq
        %v445 = vshrl.u32 %v444, 7
        %v446 = vsub.s32 0, %v445
        %v447 = vrot.slane %v442, %v446
        %v449 = vmul.f32 %v441, %v447
        %v450 = vld [vmem:[#allocation8] sm:$0x1]
        %v452 = vlaneseq
        %v453 = vshrl.u32 %v452, 7
        %v454 = vsub.s32 0, %v453
        %v455 = vrot.slane %v450, %v454
        %v457 = vadd.f32 %v449, %v455
        %v458 = vld [vmem:[%s340] sm:$0xff]
        %v459 = vadd.f32 %v457, %v458
        %460 = vst [vmem:[%s336] sm:$0xff] %v459
        %s461 = sand.u32 %s185, 1
        %s462 = scalar_lea.sflag [#allocation4], %s461
        %s463 = sand.u32 %s185, 1
        %s464 = smul.addr %s463, 8
        %s465 = scalar_lea.vmem [#allocation10], %s464
        // Predicated region
        $region61: #{tpu_custom_call.1} parent=43 // pred_check
          %p466 = pneg %p195
        $region62: #{tpu_custom_call.1} parent=43 // pred_check_branch
          %468 = sbr.rel (%p466) target = $region64
        $region63: #{tpu_custom_call.1} parent=43 // pred_region
          %s470 = ssub.s32 128, 128
          %471 = vsyncadd %s462, %s470
          %s472 = sadd.s32 %s29, %s30
          %s473 = smul.addr %s472, 128
          %s474 = scalar_lea.hbm %s6, %s473
          %s476 = sshll.u32 %s465, 4
          %s477 = int_to_ptr.vmem [resolvable:$true] %s476
          %479 = dma.vmem_to_hbm [thread:$0]  %s477, 128, %s474, %s462
        $region64: #{tpu_custom_call.1} parent=43 // pred_fallthru
          _
      $region44: #{tpu_custom_call.1} parent=5 // pred_fallthru
        _
      %p480 = scmp.le.s32.totalorder 2, %s20
      // Predicated region
      $region65: #{tpu_custom_call.1} parent=5 // pred_check
        %p481 = pneg %p480
      $region66: #{tpu_custom_call.1} parent=5 // pred_check_branch
        %483 = sbr.rel (%p481) target = $region68
      $region67: #{tpu_custom_call.1} parent=5 // pred_region
        %s484 = ssub.s32 %s20, 2
        // Predicated region
        $region69: #{tpu_custom_call.1} parent=67 // pred_check
          %p485 = pneg %p201
        $region70: #{tpu_custom_call.1} parent=67 // pred_check_branch
          %487 = sbr.rel (%p485) target = $region72
        $region71: #{tpu_custom_call.1} parent=67 // pred_region
          %s488 = sand.u32 %s186, 1
          %s489 = scalar_lea.sflag [#allocation4], %s488
          %s490 = sand.u32 %s186, 1
          %s491 = smul.addr %s490, 8
          %s492 = scalar_lea.vmem [#allocation10], %s491
          %493 = dma.done %s489, 128
        $region72: #{tpu_custom_call.1} parent=67 // pred_fallthru
          _
      $region68: #{tpu_custom_call.1} parent=5 // pred_fallthru
        _
    $region6: #{tpu_custom_call.1} parent=1 // loop_footer
      %s24 = sadd.s32 1, %s20
    $region7: #{tpu_custom_call.1} parent=1 // loop_footer_branch
      %19 = sbr.rel target = $region3
    $region8: #{tpu_custom_call.1} parent=1 // loop_exit
      _
    %494 = vsyncpa [#allocation3], 1
    %s495 = scalar_lea.sflag [#allocation3], 1
    %496 = vsyncpa %s495, 1
    %497 = vsyncpa [#allocation6], 1
    %498 = vsyncpa [#allocation9], 1
    %499 = vsyncpa [#allocation4], 1
    %s500 = scalar_lea.sflag [#allocation4], 1
    %501 = vsyncpa %s500, 1

</llo_original>
